<compile_context>
chip_gen: v5e
topology: v5e:2x2
jax: 0.10.0
libtpu: 0.0.40
codegen_flags: <defaults>
</compile_context>

<pallas_src>
import functools

import jax
import jax.numpy as jnp
from jax.experimental import pallas as pl
from jax.experimental.pallas import tpu as pltpu


def _lstm_kernel(x_ref, wih_ref, whh_ref, bg_ref, wbig_ref, bconv_ref,
                 y_ref, hn_ref, cn_ref, *, hidden, batch, seq_len):
    """Unrolled LSTM recurrence; batched input projection; hoisted 1x1 conv."""
    H, B, T = hidden, batch, seq_len
    N = x_ref.shape[-1]

    # (1) Input projection for ALL timesteps in one MXU matmul.  The 0.5
    #     sigmoid-folding and the gate bias are already baked into wih/bg.
    x2 = x_ref[...].reshape(B * T, N)
    xg = (jnp.dot(x2, wih_ref[...], preferred_element_type=jnp.float32)
          + bg_ref[...]).reshape(B, T, 4 * H)               # (B, T, 4H)

    whh = whh_ref[...]                                       # (H, 4H), invariant

    h = jnp.zeros((B, H), jnp.float32)
    c = jnp.zeros((B, H), jnp.float32)
    hs = []
    for t in range(T):                                       # fully unrolled
        gates = xg[:, t, :] + jnp.dot(
            h, whh, preferred_element_type=jnp.float32)      # (B, 4H)
        # One EUP pass over the whole gates tile; i/f/o columns were pre-scaled
        # by 0.5 so sigmoid(x) = 0.5 * (tanh(x/2) + 1); g columns unscaled.
        th = jnp.tanh(gates)
        i_g = 0.5 * th[:, 0:H] + 0.5
        f_g = 0.5 * th[:, H:2 * H] + 0.5
        g_g = th[:, 2 * H:3 * H]
        o_g = 0.5 * th[:, 3 * H:4 * H] + 0.5
        c = f_g * c + i_g * g_g
        h = o_g * jnp.tanh(c)
        hs.append(h)

    hn_ref[...] = h
    cn_ref[...] = c

    # (2) 1x1 Conv1d over channels, hoisted out of the time loop and made
    #     lane-dense: (B, T*H) @ block-diag(T*H, T_pad) -> (B, T_pad) store.
    hall = jnp.concatenate(hs, axis=1)                       # (B, T*H)
    y_ref[...] = (jnp.dot(hall, wbig_ref[...],
                          preferred_element_type=jnp.float32)
                  + bconv_ref[...])


def lstm_forward(X, params):
    """X: (B, T, num_series) float32. Returns (out (B,T,1), (h_n, c_n))."""
    w_ih, w_hh, b_ih, b_hh, w_conv, b_conv = params
    B, T, N = X.shape
    H = w_hh.shape[1]
    T_pad = max(128, -(-T // 128) * 128)                     # lane-dense y

    # Fold the sigmoid half-angle trick into i/f/o gate columns (PyTorch gate
    # order i, f, g, o); g columns stay unscaled.
    col_scale = jnp.concatenate([
        jnp.full((H,), 0.5), jnp.full((H,), 0.5),
        jnp.ones((H,)), jnp.full((H,), 0.5)]).astype(jnp.float32)
    wih_t = (w_ih.T.astype(jnp.float32) * col_scale[None, :])       # (N, 4H)
    whh_t = (w_hh.T.astype(jnp.float32) * col_scale[None, :])       # (H, 4H)
    bg = ((b_ih + b_hh).astype(jnp.float32) * col_scale).reshape(1, 4 * H)

    # Block-diagonal 1x1-conv weight: y[:, t] = h_t @ w_conv (+ bias).
    wc = w_conv.reshape(H).astype(jnp.float32)
    eye = jnp.eye(T, T_pad, dtype=jnp.float32)                       # (T, T_pad)
    wbig = (wc[None, :, None] * eye[:, None, :]).reshape(T * H, T_pad)
    bconv = b_conv.reshape(1, 1).astype(jnp.float32)

    vmem = pl.BlockSpec(memory_space=pltpu.MemorySpace.VMEM)
    y, h_n, c_n = pl.pallas_call(
        functools.partial(_lstm_kernel, hidden=H, batch=B, seq_len=T),
        out_shape=(
            jax.ShapeDtypeStruct((B, T_pad), jnp.float32),
            jax.ShapeDtypeStruct((B, H), jnp.float32),
            jax.ShapeDtypeStruct((B, H), jnp.float32),
        ),
        in_specs=[vmem] * 6,
        out_specs=(vmem, vmem, vmem),
    )(X.astype(jnp.float32), wih_t, whh_t, bg, wbig, bconv)

    out = y[:, :T, None]                                     # (B, T, 1)
    return out, (h_n[None], c_n[None])                       # each (1, B, H)


def _reference(X, params):
    """Pure-JAX reference matching torch.nn.LSTM + Conv1d(1x1)."""
    w_ih, w_hh, b_ih, b_hh, w_conv, b_conv = params
    B, T, _ = X.shape
    H = w_hh.shape[1]
    h = jnp.zeros((B, H), jnp.float32)
    c = jnp.zeros((B, H), jnp.float32)
    ys = []
    for t in range(T):
        g = X[:, t, :] @ w_ih.T + b_ih + h @ w_hh.T + b_hh
        i = jax.nn.sigmoid(g[:, 0:H])
        f = jax.nn.sigmoid(g[:, H:2 * H])
        gg = jnp.tanh(g[:, 2 * H:3 * H])
        o = jax.nn.sigmoid(g[:, 3 * H:4 * H])
        c = f * c + i * gg
        h = o * jnp.tanh(c)
        ys.append(h @ w_conv.reshape(1, H).T + b_conv.reshape(1, 1))
    out = jnp.stack(ys, axis=1)                              # (B, T, 1)
    return out, (h[None], c[None])


if __name__ == "__main__":
    num_series, hidden = 4, 32
    B, T = 2, 8

    key = jax.random.PRNGKey(0)
    ks = jax.random.split(key, 7)
    scale = 1.0 / jnp.sqrt(hidden)
    w_ih = jax.random.uniform(ks[0], (4 * hidden, num_series), jnp.float32, -scale, scale)
    w_hh = jax.random.uniform(ks[1], (4 * hidden, hidden), jnp.float32, -scale, scale)
    b_ih = jax.random.uniform(ks[2], (4 * hidden,), jnp.float32, -scale, scale)
    b_hh = jax.random.uniform(ks[3], (4 * hidden,), jnp.float32, -scale, scale)
    w_conv = jax.random.uniform(ks[4], (1, hidden, 1), jnp.float32, -scale, scale)
    b_conv = jax.random.uniform(ks[5], (1,), jnp.float32, -scale, scale)
    params = (w_ih, w_hh, b_ih, b_hh, w_conv, b_conv)

    X = jax.random.normal(ks[6], (B, T, num_series), jnp.float32)

    out, (h_n, c_n) = lstm_forward(X, params)
    jax.block_until_ready((out, h_n, c_n))

    ref_out, (ref_h, ref_c) = _reference(X, params)
    assert out.shape == (B, T, 1) and h_n.shape == (1, B, hidden) and c_n.shape == (1, B, hidden)
    assert jnp.allclose(out, ref_out, atol=1e-4, rtol=1e-4)
    assert jnp.allclose(h_n, ref_h, atol=1e-4, rtol=1e-4)
    assert jnp.allclose(c_n, ref_c, atol=1e-4, rtol=1e-4)

    print("KERNEL_OK")
</pallas_src>

<mosaic_0001>
module attributes {stable_mosaic.version = 11 : i64} {
  func.func @_lstm_kernel(%arg0: memref<2x8x4xf32, #tpu.memory_space<vmem>>, %arg1: memref<4x128xf32, #tpu.memory_space<vmem>>, %arg2: memref<32x128xf32, #tpu.memory_space<vmem>>, %arg3: memref<1x128xf32, #tpu.memory_space<vmem>>, %arg4: memref<256x128xf32, #tpu.memory_space<vmem>>, %arg5: memref<1x1xf32, #tpu.memory_space<vmem>>, %arg6: memref<2x128xf32, #tpu.memory_space<vmem>>, %arg7: memref<2x32xf32, #tpu.memory_space<vmem>>, %arg8: memref<2x32xf32, #tpu.memory_space<vmem>>) attributes {dimension_semantics = [], scalar_prefetch = 0 : i64, scratch_operands = 0 : i64, tpu.core_type = #tpu.core_type<tc>} {
    %c0 = arith.constant 0 : index
    %c0_0 = arith.constant 0 : index
    %c0_1 = arith.constant 0 : index
    %0 = vector.load %arg0[%c0, %c0_0, %c0_1] : memref<2x8x4xf32, #tpu.memory_space<vmem>>, vector<2x8x4xf32>
    %1 = vector.shape_cast %0 : vector<2x8x4xf32> to vector<16x4xf32>
    %c0_2 = arith.constant 0 : index
    %c0_3 = arith.constant 0 : index
    %2 = vector.load %arg1[%c0_2, %c0_3] : memref<4x128xf32, #tpu.memory_space<vmem>>, vector<4x128xf32>
    %cst = arith.constant dense<0.000000e+00> : vector<16x128xf32>
    %3 = tpu.matmul %1, %2, %cst {dimension_numbers = #tpu.dot_dimension_numbers<[1], [0], [0], [1], [0, 0, 1, 1], [], []>} : vector<16x4xf32>, vector<4x128xf32>, vector<16x128xf32> -> vector<16x128xf32>
    %c0_4 = arith.constant 0 : index
    %c0_5 = arith.constant 0 : index
    %4 = vector.load %arg3[%c0_4, %c0_5] : memref<1x128xf32, #tpu.memory_space<vmem>>, vector<1x128xf32>
    %5 = vector.broadcast %4 : vector<1x128xf32> to vector<16x128xf32>
    %6 = arith.addf %3, %5 : vector<16x128xf32>
    %7 = vector.shape_cast %6 : vector<16x128xf32> to vector<2x8x128xf32>
    %c0_6 = arith.constant 0 : index
    %c0_7 = arith.constant 0 : index
    %8 = vector.load %arg2[%c0_6, %c0_7] : memref<32x128xf32, #tpu.memory_space<vmem>>, vector<32x128xf32>
    %cst_8 = arith.constant 0.000000e+00 : f32
    %9 = vector.broadcast %cst_8 : f32 to vector<2x32xf32>
    %cst_9 = arith.constant 0.000000e+00 : f32
    %10 = vector.broadcast %cst_9 : f32 to vector<2x32xf32>
    %11 = vector.extract_strided_slice %7 {offsets = [0, 0, 0], sizes = [2, 1, 128], strides = [1, 1, 1]} : vector<2x8x128xf32> to vector<2x1x128xf32>
    %12 = vector.shape_cast %11 : vector<2x1x128xf32> to vector<2x128xf32>
    %cst_10 = arith.constant dense<0.000000e+00> : vector<2x128xf32>
    %13 = tpu.matmul %9, %8, %cst_10 {dimension_numbers = #tpu.dot_dimension_numbers<[1], [0], [0], [1], [0, 0, 1, 1], [], []>} : vector<2x32xf32>, vector<32x128xf32>, vector<2x128xf32> -> vector<2x128xf32>
    %14 = arith.addf %12, %13 : vector<2x128xf32>
    %15 = math.tanh %14 : vector<2x128xf32>
    %16 = vector.extract_strided_slice %15 {offsets = [0, 0], sizes = [2, 32], strides = [1, 1]} : vector<2x128xf32> to vector<2x32xf32>
    %cst_11 = arith.constant 5.000000e-01 : f32
    %17 = vector.broadcast %cst_11 : f32 to vector<2x32xf32>
    %18 = arith.mulf %17, %16 : vector<2x32xf32>
    %cst_12 = arith.constant 5.000000e-01 : f32
    %19 = vector.broadcast %cst_12 : f32 to vector<2x32xf32>
    %20 = arith.addf %18, %19 : vector<2x32xf32>
    %21 = vector.extract_strided_slice %15 {offsets = [0, 32], sizes = [2, 32], strides = [1, 1]} : vector<2x128xf32> to vector<2x32xf32>
    %cst_13 = arith.constant 5.000000e-01 : f32
    %22 = vector.broadcast %cst_13 : f32 to vector<2x32xf32>
    %23 = arith.mulf %22, %21 : vector<2x32xf32>
    %cst_14 = arith.constant 5.000000e-01 : f32
    %24 = vector.broadcast %cst_14 : f32 to vector<2x32xf32>
    %25 = arith.addf %23, %24 : vector<2x32xf32>
    %26 = vector.extract_strided_slice %15 {offsets = [0, 64], sizes = [2, 32], strides = [1, 1]} : vector<2x128xf32> to vector<2x32xf32>
    %27 = vector.extract_strided_slice %15 {offsets = [0, 96], sizes = [2, 32], strides = [1, 1]} : vector<2x128xf32> to vector<2x32xf32>
    %cst_15 = arith.constant 5.000000e-01 : f32
    %28 = vector.broadcast %cst_15 : f32 to vector<2x32xf32>
    %29 = arith.mulf %28, %27 : vector<2x32xf32>
    %cst_16 = arith.constant 5.000000e-01 : f32
    %30 = vector.broadcast %cst_16 : f32 to vector<2x32xf32>
    %31 = arith.addf %29, %30 : vector<2x32xf32>
    %32 = arith.mulf %25, %10 : vector<2x32xf32>
    %33 = arith.mulf %20, %26 : vector<2x32xf32>
    %34 = arith.addf %32, %33 : vector<2x32xf32>
    %35 = math.tanh %34 : vector<2x32xf32>
    %36 = arith.mulf %31, %35 : vector<2x32xf32>
    %37 = vector.extract_strided_slice %7 {offsets = [0, 1, 0], sizes = [2, 1, 128], strides = [1, 1, 1]} : vector<2x8x128xf32> to vector<2x1x128xf32>
    %38 = vector.shape_cast %37 : vector<2x1x128xf32> to vector<2x128xf32>
    %cst_17 = arith.constant dense<0.000000e+00> : vector<2x128xf32>
    %39 = tpu.matmul %36, %8, %cst_17 {dimension_numbers = #tpu.dot_dimension_numbers<[1], [0], [0], [1], [0, 0, 1, 1], [], []>} : vector<2x32xf32>, vector<32x128xf32>, vector<2x128xf32> -> vector<2x128xf32>
    %40 = arith.addf %38, %39 : vector<2x128xf32>
    %41 = math.tanh %40 : vector<2x128xf32>
    %42 = vector.extract_strided_slice %41 {offsets = [0, 0], sizes = [2, 32], strides = [1, 1]} : vector<2x128xf32> to vector<2x32xf32>
    %cst_18 = arith.constant 5.000000e-01 : f32
    %43 = vector.broadcast %cst_18 : f32 to vector<2x32xf32>
    %44 = arith.mulf %43, %42 : vector<2x32xf32>
    %cst_19 = arith.constant 5.000000e-01 : f32
    %45 = vector.broadcast %cst_19 : f32 to vector<2x32xf32>
    %46 = arith.addf %44, %45 : vector<2x32xf32>
    %47 = vector.extract_strided_slice %41 {offsets = [0, 32], sizes = [2, 32], strides = [1, 1]} : vector<2x128xf32> to vector<2x32xf32>
    %cst_20 = arith.constant 5.000000e-01 : f32
    %48 = vector.broadcast %cst_20 : f32 to vector<2x32xf32>
    %49 = arith.mulf %48, %47 : vector<2x32xf32>
    %cst_21 = arith.constant 5.000000e-01 : f32
    %50 = vector.broadcast %cst_21 : f32 to vector<2x32xf32>
    %51 = arith.addf %49, %50 : vector<2x32xf32>
    %52 = vector.extract_strided_slice %41 {offsets = [0, 64], sizes = [2, 32], strides = [1, 1]} : vector<2x128xf32> to vector<2x32xf32>
    %53 = vector.extract_strided_slice %41 {offsets = [0, 96], sizes = [2, 32], strides = [1, 1]} : vector<2x128xf32> to vector<2x32xf32>
    %cst_22 = arith.constant 5.000000e-01 : f32
    %54 = vector.broadcast %cst_22 : f32 to vector<2x32xf32>
    %55 = arith.mulf %54, %53 : vector<2x32xf32>
    %cst_23 = arith.constant 5.000000e-01 : f32
    %56 = vector.broadcast %cst_23 : f32 to vector<2x32xf32>
    %57 = arith.addf %55, %56 : vector<2x32xf32>
    %58 = arith.mulf %51, %34 : vector<2x32xf32>
    %59 = arith.mulf %46, %52 : vector<2x32xf32>
    %60 = arith.addf %58, %59 : vector<2x32xf32>
    %61 = math.tanh %60 : vector<2x32xf32>
    %62 = arith.mulf %57, %61 : vector<2x32xf32>
    %63 = vector.extract_strided_slice %7 {offsets = [0, 2, 0], sizes = [2, 1, 128], strides = [1, 1, 1]} : vector<2x8x128xf32> to vector<2x1x128xf32>
    %64 = vector.shape_cast %63 : vector<2x1x128xf32> to vector<2x128xf32>
    %cst_24 = arith.constant dense<0.000000e+00> : vector<2x128xf32>
    %65 = tpu.matmul %62, %8, %cst_24 {dimension_numbers = #tpu.dot_dimension_numbers<[1], [0], [0], [1], [0, 0, 1, 1], [], []>} : vector<2x32xf32>, vector<32x128xf32>, vector<2x128xf32> -> vector<2x128xf32>
    %66 = arith.addf %64, %65 : vector<2x128xf32>
    %67 = math.tanh %66 : vector<2x128xf32>
    %68 = vector.extract_strided_slice %67 {offsets = [0, 0], sizes = [2, 32], strides = [1, 1]} : vector<2x128xf32> to vector<2x32xf32>
    %cst_25 = arith.constant 5.000000e-01 : f32
    %69 = vector.broadcast %cst_25 : f32 to vector<2x32xf32>
    %70 = arith.mulf %69, %68 : vector<2x32xf32>
    %cst_26 = arith.constant 5.000000e-01 : f32
    %71 = vector.broadcast %cst_26 : f32 to vector<2x32xf32>
    %72 = arith.addf %70, %71 : vector<2x32xf32>
    %73 = vector.extract_strided_slice %67 {offsets = [0, 32], sizes = [2, 32], strides = [1, 1]} : vector<2x128xf32> to vector<2x32xf32>
    %cst_27 = arith.constant 5.000000e-01 : f32
    %74 = vector.broadcast %cst_27 : f32 to vector<2x32xf32>
    %75 = arith.mulf %74, %73 : vector<2x32xf32>
    %cst_28 = arith.constant 5.000000e-01 : f32
    %76 = vector.broadcast %cst_28 : f32 to vector<2x32xf32>
    %77 = arith.addf %75, %76 : vector<2x32xf32>
    %78 = vector.extract_strided_slice %67 {offsets = [0, 64], sizes = [2, 32], strides = [1, 1]} : vector<2x128xf32> to vector<2x32xf32>
    %79 = vector.extract_strided_slice %67 {offsets = [0, 96], sizes = [2, 32], strides = [1, 1]} : vector<2x128xf32> to vector<2x32xf32>
    %cst_29 = arith.constant 5.000000e-01 : f32
    %80 = vector.broadcast %cst_29 : f32 to vector<2x32xf32>
    %81 = arith.mulf %80, %79 : vector<2x32xf32>
    %cst_30 = arith.constant 5.000000e-01 : f32
    %82 = vector.broadcast %cst_30 : f32 to vector<2x32xf32>
    %83 = arith.addf %81, %82 : vector<2x32xf32>
    %84 = arith.mulf %77, %60 : vector<2x32xf32>
    %85 = arith.mulf %72, %78 : vector<2x32xf32>
    %86 = arith.addf %84, %85 : vector<2x32xf32>
    %87 = math.tanh %86 : vector<2x32xf32>
    %88 = arith.mulf %83, %87 : vector<2x32xf32>
    %89 = vector.extract_strided_slice %7 {offsets = [0, 3, 0], sizes = [2, 1, 128], strides = [1, 1, 1]} : vector<2x8x128xf32> to vector<2x1x128xf32>
    %90 = vector.shape_cast %89 : vector<2x1x128xf32> to vector<2x128xf32>
    %cst_31 = arith.constant dense<0.000000e+00> : vector<2x128xf32>
    %91 = tpu.matmul %88, %8, %cst_31 {dimension_numbers = #tpu.dot_dimension_numbers<[1], [0], [0], [1], [0, 0, 1, 1], [], []>} : vector<2x32xf32>, vector<32x128xf32>, vector<2x128xf32> -> vector<2x128xf32>
    %92 = arith.addf %90, %91 : vector<2x128xf32>
    %93 = math.tanh %92 : vector<2x128xf32>
    %94 = vector.extract_strided_slice %93 {offsets = [0, 0], sizes = [2, 32], strides = [1, 1]} : vector<2x128xf32> to vector<2x32xf32>
    %cst_32 = arith.constant 5.000000e-01 : f32
    %95 = vector.broadcast %cst_32 : f32 to vector<2x32xf32>
    %96 = arith.mulf %95, %94 : vector<2x32xf32>
    %cst_33 = arith.constant 5.000000e-01 : f32
    %97 = vector.broadcast %cst_33 : f32 to vector<2x32xf32>
    %98 = arith.addf %96, %97 : vector<2x32xf32>
    %99 = vector.extract_strided_slice %93 {offsets = [0, 32], sizes = [2, 32], strides = [1, 1]} : vector<2x128xf32> to vector<2x32xf32>
    %cst_34 = arith.constant 5.000000e-01 : f32
    %100 = vector.broadcast %cst_34 : f32 to vector<2x32xf32>
    %101 = arith.mulf %100, %99 : vector<2x32xf32>
    %cst_35 = arith.constant 5.000000e-01 : f32
    %102 = vector.broadcast %cst_35 : f32 to vector<2x32xf32>
    %103 = arith.addf %101, %102 : vector<2x32xf32>
    %104 = vector.extract_strided_slice %93 {offsets = [0, 64], sizes = [2, 32], strides = [1, 1]} : vector<2x128xf32> to vector<2x32xf32>
    %105 = vector.extract_strided_slice %93 {offsets = [0, 96], sizes = [2, 32], strides = [1, 1]} : vector<2x128xf32> to vector<2x32xf32>
    %cst_36 = arith.constant 5.000000e-01 : f32
    %106 = vector.broadcast %cst_36 : f32 to vector<2x32xf32>
    %107 = arith.mulf %106, %105 : vector<2x32xf32>
    %cst_37 = arith.constant 5.000000e-01 : f32
    %108 = vector.broadcast %cst_37 : f32 to vector<2x32xf32>
    %109 = arith.addf %107, %108 : vector<2x32xf32>
    %110 = arith.mulf %103, %86 : vector<2x32xf32>
    %111 = arith.mulf %98, %104 : vector<2x32xf32>
    %112 = arith.addf %110, %111 : vector<2x32xf32>
    %113 = math.tanh %112 : vector<2x32xf32>
    %114 = arith.mulf %109, %113 : vector<2x32xf32>
    %115 = vector.extract_strided_slice %7 {offsets = [0, 4, 0], sizes = [2, 1, 128], strides = [1, 1, 1]} : vector<2x8x128xf32> to vector<2x1x128xf32>
    %116 = vector.shape_cast %115 : vector<2x1x128xf32> to vector<2x128xf32>
    %cst_38 = arith.constant dense<0.000000e+00> : vector<2x128xf32>
    %117 = tpu.matmul %114, %8, %cst_38 {dimension_numbers = #tpu.dot_dimension_numbers<[1], [0], [0], [1], [0, 0, 1, 1], [], []>} : vector<2x32xf32>, vector<32x128xf32>, vector<2x128xf32> -> vector<2x128xf32>
    %118 = arith.addf %116, %117 : vector<2x128xf32>
    %119 = math.tanh %118 : vector<2x128xf32>
    %120 = vector.extract_strided_slice %119 {offsets = [0, 0], sizes = [2, 32], strides = [1, 1]} : vector<2x128xf32> to vector<2x32xf32>
    %cst_39 = arith.constant 5.000000e-01 : f32
    %121 = vector.broadcast %cst_39 : f32 to vector<2x32xf32>
    %122 = arith.mulf %121, %120 : vector<2x32xf32>
    %cst_40 = arith.constant 5.000000e-01 : f32
    %123 = vector.broadcast %cst_40 : f32 to vector<2x32xf32>
    %124 = arith.addf %122, %123 : vector<2x32xf32>
    %125 = vector.extract_strided_slice %119 {offsets = [0, 32], sizes = [2, 32], strides = [1, 1]} : vector<2x128xf32> to vector<2x32xf32>
    %cst_41 = arith.constant 5.000000e-01 : f32
    %126 = vector.broadcast %cst_41 : f32 to vector<2x32xf32>
    %127 = arith.mulf %126, %125 : vector<2x32xf32>
    %cst_42 = arith.constant 5.000000e-01 : f32
    %128 = vector.broadcast %cst_42 : f32 to vector<2x32xf32>
    %129 = arith.addf %127, %128 : vector<2x32xf32>
    %130 = vector.extract_strided_slice %119 {offsets = [0, 64], sizes = [2, 32], strides = [1, 1]} : vector<2x128xf32> to vector<2x32xf32>
    %131 = vector.extract_strided_slice %119 {offsets = [0, 96], sizes = [2, 32], strides = [1, 1]} : vector<2x128xf32> to vector<2x32xf32>
    %cst_43 = arith.constant 5.000000e-01 : f32
    %132 = vector.broadcast %cst_43 : f32 to vector<2x32xf32>
    %133 = arith.mulf %132, %131 : vector<2x32xf32>
    %cst_44 = arith.constant 5.000000e-01 : f32
    %134 = vector.broadcast %cst_44 : f32 to vector<2x32xf32>
    %135 = arith.addf %133, %134 : vector<2x32xf32>
    %136 = arith.mulf %129, %112 : vector<2x32xf32>
    %137 = arith.mulf %124, %130 : vector<2x32xf32>
    %138 = arith.addf %136, %137 : vector<2x32xf32>
    %139 = math.tanh %138 : vector<2x32xf32>
    %140 = arith.mulf %135, %139 : vector<2x32xf32>
    %141 = vector.extract_strided_slice %7 {offsets = [0, 5, 0], sizes = [2, 1, 128], strides = [1, 1, 1]} : vector<2x8x128xf32> to vector<2x1x128xf32>
    %142 = vector.shape_cast %141 : vector<2x1x128xf32> to vector<2x128xf32>
    %cst_45 = arith.constant dense<0.000000e+00> : vector<2x128xf32>
    %143 = tpu.matmul %140, %8, %cst_45 {dimension_numbers = #tpu.dot_dimension_numbers<[1], [0], [0], [1], [0, 0, 1, 1], [], []>} : vector<2x32xf32>, vector<32x128xf32>, vector<2x128xf32> -> vector<2x128xf32>
    %144 = arith.addf %142, %143 : vector<2x128xf32>
    %145 = math.tanh %144 : vector<2x128xf32>
    %146 = vector.extract_strided_slice %145 {offsets = [0, 0], sizes = [2, 32], strides = [1, 1]} : vector<2x128xf32> to vector<2x32xf32>
    %cst_46 = arith.constant 5.000000e-01 : f32
    %147 = vector.broadcast %cst_46 : f32 to vector<2x32xf32>
    %148 = arith.mulf %147, %146 : vector<2x32xf32>
    %cst_47 = arith.constant 5.000000e-01 : f32
    %149 = vector.broadcast %cst_47 : f32 to vector<2x32xf32>
    %150 = arith.addf %148, %149 : vector<2x32xf32>
    %151 = vector.extract_strided_slice %145 {offsets = [0, 32], sizes = [2, 32], strides = [1, 1]} : vector<2x128xf32> to vector<2x32xf32>
    %cst_48 = arith.constant 5.000000e-01 : f32
    %152 = vector.broadcast %cst_48 : f32 to vector<2x32xf32>
    %153 = arith.mulf %152, %151 : vector<2x32xf32>
    %cst_49 = arith.constant 5.000000e-01 : f32
    %154 = vector.broadcast %cst_49 : f32 to vector<2x32xf32>
    %155 = arith.addf %153, %154 : vector<2x32xf32>
    %156 = vector.extract_strided_slice %145 {offsets = [0, 64], sizes = [2, 32], strides = [1, 1]} : vector<2x128xf32> to vector<2x32xf32>
    %157 = vector.extract_strided_slice %145 {offsets = [0, 96], sizes = [2, 32], strides = [1, 1]} : vector<2x128xf32> to vector<2x32xf32>
    %cst_50 = arith.constant 5.000000e-01 : f32
    %158 = vector.broadcast %cst_50 : f32 to vector<2x32xf32>
    %159 = arith.mulf %158, %157 : vector<2x32xf32>
    %cst_51 = arith.constant 5.000000e-01 : f32
    %160 = vector.broadcast %cst_51 : f32 to vector<2x32xf32>
    %161 = arith.addf %159, %160 : vector<2x32xf32>
    %162 = arith.mulf %155, %138 : vector<2x32xf32>
    %163 = arith.mulf %150, %156 : vector<2x32xf32>
    %164 = arith.addf %162, %163 : vector<2x32xf32>
    %165 = math.tanh %164 : vector<2x32xf32>
    %166 = arith.mulf %161, %165 : vector<2x32xf32>
    %167 = vector.extract_strided_slice %7 {offsets = [0, 6, 0], sizes = [2, 1, 128], strides = [1, 1, 1]} : vector<2x8x128xf32> to vector<2x1x128xf32>
    %168 = vector.shape_cast %167 : vector<2x1x128xf32> to vector<2x128xf32>
    %cst_52 = arith.constant dense<0.000000e+00> : vector<2x128xf32>
    %169 = tpu.matmul %166, %8, %cst_52 {dimension_numbers = #tpu.dot_dimension_numbers<[1], [0], [0], [1], [0, 0, 1, 1], [], []>} : vector<2x32xf32>, vector<32x128xf32>, vector<2x128xf32> -> vector<2x128xf32>
    %170 = arith.addf %168, %169 : vector<2x128xf32>
    %171 = math.tanh %170 : vector<2x128xf32>
    %172 = vector.extract_strided_slice %171 {offsets = [0, 0], sizes = [2, 32], strides = [1, 1]} : vector<2x128xf32> to vector<2x32xf32>
    %cst_53 = arith.constant 5.000000e-01 : f32
    %173 = vector.broadcast %cst_53 : f32 to vector<2x32xf32>
    %174 = arith.mulf %173, %172 : vector<2x32xf32>
    %cst_54 = arith.constant 5.000000e-01 : f32
    %175 = vector.broadcast %cst_54 : f32 to vector<2x32xf32>
    %176 = arith.addf %174, %175 : vector<2x32xf32>
    %177 = vector.extract_strided_slice %171 {offsets = [0, 32], sizes = [2, 32], strides = [1, 1]} : vector<2x128xf32> to vector<2x32xf32>
    %cst_55 = arith.constant 5.000000e-01 : f32
    %178 = vector.broadcast %cst_55 : f32 to vector<2x32xf32>
    %179 = arith.mulf %178, %177 : vector<2x32xf32>
    %cst_56 = arith.constant 5.000000e-01 : f32
    %180 = vector.broadcast %cst_56 : f32 to vector<2x32xf32>
    %181 = arith.addf %179, %180 : vector<2x32xf32>
    %182 = vector.extract_strided_slice %171 {offsets = [0, 64], sizes = [2, 32], strides = [1, 1]} : vector<2x128xf32> to vector<2x32xf32>
    %183 = vector.extract_strided_slice %171 {offsets = [0, 96], sizes = [2, 32], strides = [1, 1]} : vector<2x128xf32> to vector<2x32xf32>
    %cst_57 = arith.constant 5.000000e-01 : f32
    %184 = vector.broadcast %cst_57 : f32 to vector<2x32xf32>
    %185 = arith.mulf %184, %183 : vector<2x32xf32>
    %cst_58 = arith.constant 5.000000e-01 : f32
    %186 = vector.broadcast %cst_58 : f32 to vector<2x32xf32>
    %187 = arith.addf %185, %186 : vector<2x32xf32>
    %188 = arith.mulf %181, %164 : vector<2x32xf32>
    %189 = arith.mulf %176, %182 : vector<2x32xf32>
    %190 = arith.addf %188, %189 : vector<2x32xf32>
    %191 = math.tanh %190 : vector<2x32xf32>
    %192 = arith.mulf %187, %191 : vector<2x32xf32>
    %193 = vector.extract_strided_slice %7 {offsets = [0, 7, 0], sizes = [2, 1, 128], strides = [1, 1, 1]} : vector<2x8x128xf32> to vector<2x1x128xf32>
    %194 = vector.shape_cast %193 : vector<2x1x128xf32> to vector<2x128xf32>
    %cst_59 = arith.constant dense<0.000000e+00> : vector<2x128xf32>
    %195 = tpu.matmul %192, %8, %cst_59 {dimension_numbers = #tpu.dot_dimension_numbers<[1], [0], [0], [1], [0, 0, 1, 1], [], []>} : vector<2x32xf32>, vector<32x128xf32>, vector<2x128xf32> -> vector<2x128xf32>
    %196 = arith.addf %194, %195 : vector<2x128xf32>
    %197 = math.tanh %196 : vector<2x128xf32>
    %198 = vector.extract_strided_slice %197 {offsets = [0, 0], sizes = [2, 32], strides = [1, 1]} : vector<2x128xf32> to vector<2x32xf32>
    %cst_60 = arith.constant 5.000000e-01 : f32
    %199 = vector.broadcast %cst_60 : f32 to vector<2x32xf32>
    %200 = arith.mulf %199, %198 : vector<2x32xf32>
    %cst_61 = arith.constant 5.000000e-01 : f32
    %201 = vector.broadcast %cst_61 : f32 to vector<2x32xf32>
    %202 = arith.addf %200, %201 : vector<2x32xf32>
    %203 = vector.extract_strided_slice %197 {offsets = [0, 32], sizes = [2, 32], strides = [1, 1]} : vector<2x128xf32> to vector<2x32xf32>
    %cst_62 = arith.constant 5.000000e-01 : f32
    %204 = vector.broadcast %cst_62 : f32 to vector<2x32xf32>
    %205 = arith.mulf %204, %203 : vector<2x32xf32>
    %cst_63 = arith.constant 5.000000e-01 : f32
    %206 = vector.broadcast %cst_63 : f32 to vector<2x32xf32>
    %207 = arith.addf %205, %206 : vector<2x32xf32>
    %208 = vector.extract_strided_slice %197 {offsets = [0, 64], sizes = [2, 32], strides = [1, 1]} : vector<2x128xf32> to vector<2x32xf32>
    %209 = vector.extract_strided_slice %197 {offsets = [0, 96], sizes = [2, 32], strides = [1, 1]} : vector<2x128xf32> to vector<2x32xf32>
    %cst_64 = arith.constant 5.000000e-01 : f32
    %210 = vector.broadcast %cst_64 : f32 to vector<2x32xf32>
    %211 = arith.mulf %210, %209 : vector<2x32xf32>
    %cst_65 = arith.constant 5.000000e-01 : f32
    %212 = vector.broadcast %cst_65 : f32 to vector<2x32xf32>
    %213 = arith.addf %211, %212 : vector<2x32xf32>
    %214 = arith.mulf %207, %190 : vector<2x32xf32>
    %215 = arith.mulf %202, %208 : vector<2x32xf32>
    %216 = arith.addf %214, %215 : vector<2x32xf32>
    %217 = math.tanh %216 : vector<2x32xf32>
    %218 = arith.mulf %213, %217 : vector<2x32xf32>
    %c0_66 = arith.constant 0 : index
    %c0_67 = arith.constant 0 : index
    %219 = vector.load %arg7[%c0_66, %c0_67] : memref<2x32xf32, #tpu.memory_space<vmem>>, vector<2x32xf32>
    tpu.vector_store %arg7[%c0_66, %c0_67], %218 {strides = array<i32>} : memref<2x32xf32, #tpu.memory_space<vmem>>, vector<2x32xf32>,
    %c0_68 = arith.constant 0 : index
    %c0_69 = arith.constant 0 : index
    %220 = vector.load %arg8[%c0_68, %c0_69] : memref<2x32xf32, #tpu.memory_space<vmem>>, vector<2x32xf32>
    tpu.vector_store %arg8[%c0_68, %c0_69], %216 {strides = array<i32>} : memref<2x32xf32, #tpu.memory_space<vmem>>, vector<2x32xf32>,
    %221 = tpu.concatenate %36, %62, %88, %114, %140, %166, %192, %218 in 1 : vector<2x32xf32>, vector<2x32xf32>, vector<2x32xf32>, vector<2x32xf32>, vector<2x32xf32>, vector<2x32xf32>, vector<2x32xf32>, vector<2x32xf32> -> vector<2x256xf32>
    %c0_70 = arith.constant 0 : index
    %c0_71 = arith.constant 0 : index
    %222 = vector.load %arg4[%c0_70, %c0_71] : memref<256x128xf32, #tpu.memory_space<vmem>>, vector<256x128xf32>
    %cst_72 = arith.constant dense<0.000000e+00> : vector<2x128xf32>
    %223 = tpu.matmul %221, %222, %cst_72 {dimension_numbers = #tpu.dot_dimension_numbers<[1], [0], [0], [1], [0, 0, 1, 1], [], []>} : vector<2x256xf32>, vector<256x128xf32>, vector<2x128xf32> -> vector<2x128xf32>
    %c0_73 = arith.constant 0 : index
    %c0_74 = arith.constant 0 : index
    %224 = vector.load %arg5[%c0_73, %c0_74] : memref<1x1xf32, #tpu.memory_space<vmem>>, vector<1x1xf32>
    %225 = vector.broadcast %224 : vector<1x1xf32> to vector<2x128xf32>
    %226 = arith.addf %223, %225 : vector<2x128xf32>
    %c0_75 = arith.constant 0 : index
    %c0_76 = arith.constant 0 : index
    %227 = vector.load %arg6[%c0_75, %c0_76] : memref<2x128xf32, #tpu.memory_space<vmem>>, vector<2x128xf32>
    tpu.vector_store %arg6[%c0_75, %c0_76], %226 {strides = array<i32>} : memref<2x128xf32, #tpu.memory_space<vmem>>, vector<2x128xf32>,
    return
  }
}

</mosaic_0001>

<llo_original>
// kernel: tpu_custom_call.1
$region0: #{tpu_custom_call.1}
  #allocation0 [shape = 'u32[]', space=smem, size = 0x4, offset = 0x4, fixed_abs, tag = 'smem constant byte address 0x4 - core index']
  #allocation1 [shape = 'u32[72,128]{1,0:T(1,128)}', space=vmem, size = 0x9000, scoped, tag = 'internal scratch']
  #allocation2 [shape = 'f32[1,1]{1,0:T(1,128)S(1)}', space=vmem, size = 0x200, scoped, tag = 'scoped memory for tpu_custom_call.1']
  %s0 = inlined_call_operand.vmem [shape: f32[2,8,4], index: 0, kind: input, shape index: {}]
  %s1 = inlined_call_operand.vmem [shape: f32[4,128], index: 1, kind: input, shape index: {}]
  %s2 = inlined_call_operand.hbm [shape: f32[32,128], index: 2, kind: input, shape index: {}]
  %s3 = inlined_call_operand.vmem [shape: f32[1,128], index: 3, kind: input, shape index: {}]
  %s4 = inlined_call_operand.hbm [shape: f32[256,128], index: 4, kind: input, shape index: {}]
  %s5 = inlined_call_operand.<no memory space> [shape: f32[1,1], index: 5, kind: input, shape index: {}]
  %s6 = inlined_call_operand.hbm [shape: f32[2,128], index: 6, kind: output, shape index: {0}]
  %s7 = inlined_call_operand.hbm [shape: f32[2,32], index: 7, kind: output, shape index: {1}]
  %s8 = inlined_call_operand.hbm [shape: f32[2,32], index: 8, kind: output, shape index: {2}]
  %9 = xla_tuple %s6, %s7, %s8
  %s10 = sld [smem:[#allocation0]]
  $region58: #{tpu_custom_call.1} parent=0
    _
  %s12 = ssub.s32 1, %s10
  %s13 = scalar_select 0, %s12, %s10
  %v14 = vstv %s5
  %15 = vst [vmem:[#allocation2] sm:$0x1] %v14
  $region1: #{tpu_custom_call.1} parent=0
    #allocation3 [shape = 'u8[16384]{0}', space=vmem, size = 0x4000, scoped, tag = 'input window, operand 2, single buffered']
    #allocation4 [shape = 's32[1]{0}', space=sflag, size = 0x4, scoped, tag = 'scoped memory for tpu_custom_call.1']
    #allocation5 [shape = 's32[1]{0}', space=sflag, size = 0x4, scoped, tag = 'scoped memory for tpu_custom_call.1']
    #allocation6 [shape = 'u8[131072]{0}', space=vmem, size = 0x20000, scoped, tag = 'input window, operand 4, single buffered']
    #allocation7 [shape = 's32[1]{0}', space=sflag, size = 0x4, scoped, tag = 'scoped memory for tpu_custom_call.1']
    #allocation8 [shape = 'u8[1024]{0}', space=vmem, size = 0x400, scoped, tag = 'output window, operand 0, single buffered']
    #allocation9 [shape = 'u8[1024]{0}', space=vmem, size = 0x400, scoped, tag = 'output window, operand 1, single buffered']
    #allocation10 [shape = 's32[1]{0}', space=sflag, size = 0x4, scoped, tag = 'scoped memory for tpu_custom_call.1']
    #allocation11 [shape = 'u8[1024]{0}', space=vmem, size = 0x400, scoped, tag = 'output window, operand 2, single buffered']
    %16 = vsyncpa [#allocation4], 0
    %17 = vsyncpa [#allocation7], 0
    %18 = vsyncpa [#allocation5], 0
    %19 = vsyncpa [#allocation10], 0
    // Predicated region
    $region2: #{tpu_custom_call.1} parent=1 // pred_check
      _
    $region3: #{tpu_custom_call.1} parent=1 // pred_check_branch
      %21 = sbr.rel (0) target = $region5
    $region4: #{tpu_custom_call.1} parent=1 // pred_region
      _
    $region5: #{tpu_custom_call.1} parent=1 // pred_fallthru
      _
    // Predicated region
    $region6: #{tpu_custom_call.1} parent=1 // pred_check
      _
    $region7: #{tpu_custom_call.1} parent=1 // pred_check_branch
      %23 = sbr.rel (0) target = $region9
    $region8: #{tpu_custom_call.1} parent=1 // pred_region
      _
    $region9: #{tpu_custom_call.1} parent=1 // pred_fallthru
      _
    // Predicated region
    $region10: #{tpu_custom_call.1} parent=1 // pred_check
      _
    $region11: #{tpu_custom_call.1} parent=1 // pred_check_branch
      %25 = sbr.rel (0) target = $region13
    $region12: #{tpu_custom_call.1} parent=1 // pred_region
      %27 = vsyncadd [#allocation4], 0
      %s28 = sshll.u32 %s2, 4
      %s29 = int_to_ptr.hbm [resolvable:$true] %s28
      %s30 = sshll.u32 [#allocation3], 4
      %s31 = int_to_ptr.vmem [resolvable:$true] %s30
      %36 = dma.hbm_to_vmem [thread:$0]  %s29, 512, %s31, [#allocation4], 128, 128, 8
    $region13: #{tpu_custom_call.1} parent=1 // pred_fallthru
      _
    // Predicated region
    $region14: #{tpu_custom_call.1} parent=1 // pred_check
      _
    $region15: #{tpu_custom_call.1} parent=1 // pred_check_branch
      %38 = sbr.rel (0) target = $region17
    $region16: #{tpu_custom_call.1} parent=1 // pred_region
      _
    $region17: #{tpu_custom_call.1} parent=1 // pred_fallthru
      _
    // Predicated region
    $region18: #{tpu_custom_call.1} parent=1 // pred_check
      _
    $region19: #{tpu_custom_call.1} parent=1 // pred_check_branch
      %40 = sbr.rel (0) target = $region21
    $region20: #{tpu_custom_call.1} parent=1 // pred_region
      %42 = vsyncadd [#allocation7], 0
      %s43 = sshll.u32 %s4, 4
      %s44 = int_to_ptr.hbm [resolvable:$true] %s43
      %s45 = sshll.u32 [#allocation6], 4
      %s46 = int_to_ptr.vmem [resolvable:$true] %s45
      %51 = dma.hbm_to_vmem [thread:$0]  %s44, 4096, %s46, [#allocation7], 128, 128, 8
    $region21: #{tpu_custom_call.1} parent=1 // pred_fallthru
      _
    // Predicated region
    $region22: #{tpu_custom_call.1} parent=1 // pred_check
      _
    $region23: #{tpu_custom_call.1} parent=1 // pred_check_branch
      %53 = sbr.rel (0) target = $region25
    $region24: #{tpu_custom_call.1} parent=1 // pred_region
      _
    $region25: #{tpu_custom_call.1} parent=1 // pred_fallthru
      _
    // Predicated region
    $region26: #{tpu_custom_call.1} parent=1 // pred_check
      _
    $region27: #{tpu_custom_call.1} parent=1 // pred_check_branch
      %55 = sbr.rel (0) target = $region29
    $region28: #{tpu_custom_call.1} parent=1 // pred_region
      %57 = dma.done [#allocation4], 512
    $region29: #{tpu_custom_call.1} parent=1 // pred_fallthru
      _
    // Predicated region
    $region30: #{tpu_custom_call.1} parent=1 // pred_check
      _
    $region31: #{tpu_custom_call.1} parent=1 // pred_check_branch
      %59 = sbr.rel (0) target = $region33
    $region32: #{tpu_custom_call.1} parent=1 // pred_region
      %61 = dma.done [#allocation7], 4096
    $region33: #{tpu_custom_call.1} parent=1 // pred_fallthru
      _
    %v62 = vld [vmem:[%s0] sm:$0xff]
    %v63 = vld [vmem:[%s0 + $0x8] sm:$0xff]
    %v64 = vld [vmem:[%s1] sm:$0xf]
    %v65 = vld [vmem:[%s3] sm:$0x1]
    %v67 = vperm.slane %v65, 0
    %vm69 = vcmask 31744
    %v71 = vsel %vm69, %v62, 0
    %v74 = vsel %vm69, %v63, 0
    %vm76 = vcmask 1043456
    %v78 = vsel %vm76, %v64, 0
    %80 = vmatpush.msra.mxu0 0.0
    %81 = vmatpush.msra.mxu0 0.0
    %82 = vmatpush.msra.mxu0 0.0
    %83 = vmatpush.msra.mxu0 0.0
    %84 = vmatpush.msra.mxu0 0.0
    %85 = vmatpush.msra.mxu0 0.0
    %86 = vmatpush.msra.mxu0 0.0
    %87 = vmatpush.msra.mxu0 0.0
    %88 = vmatpush.msra.mxu0 0.0
    %89 = vmatpush.msra.mxu0 0.0
    %90 = vmatpush.msra.mxu0 0.0
    %91 = vmatpush.msra.mxu0 0.0
    %92 = vmatpush.msra.mxu0 0.0
    %93 = vmatpush.msra.mxu0 0.0
    %94 = vmatpush.msra.mxu0 0.0
    %95 = vmatpush.msra.mxu0 %v78
    %96 = vmatmul.f32.gmra.mxu0 %v71
    %v97 = vpop.f32.mrf.mxu0
    %v98 = vadd.f32 %v67, %v97
    %99 = vmatmul.f32.gmra.mxu0 %v74
    %v100 = vpop.f32.mrf.mxu0
    %v101 = vadd.f32 %v67, %v100
    %102 = vdwg.mxu0
    %v103 = vld [vmem:[#allocation3] sm:$0xff]
    %v104 = vld [vmem:[#allocation3 + $0x8] sm:$0xff]
    %v105 = vld [vmem:[#allocation3 + $0x10] sm:$0xff]
    %v106 = vld [vmem:[#allocation3 + $0x18] sm:$0xff]
    %vm107 = vcmask 261120
    %v109 = vsel %vm107, 0.0, 0
    %111 = vmatpush.msra.mxu0 0.0
    %112 = vmatpush.msra.mxu0 0.0
    %113 = vmatpush.msra.mxu0 0.0
    %114 = vmatpush.msra.mxu0 0.0
    %115 = vmatpush.msra.mxu0 0.0
    %116 = vmatpush.msra.mxu0 0.0
    %117 = vmatpush.msra.mxu0 0.0
    %118 = vmatpush.msra.mxu0 0.0
    %119 = vmatpush.msra.mxu0 0.0
    %120 = vmatpush.msra.mxu0 0.0
    %121 = vmatpush.msra.mxu0 0.0
    %122 = vmatpush.msra.mxu0 0.0
    %123 = vmatpush.msra.mxu0 %v106
    %124 = vmatpush.msra.mxu0 %v105
    %125 = vmatpush.msra.mxu0 %v104
    %126 = vmatpush.msra.mxu0 %v103
    %127 = vmatmul.f32.gmra.mxu0 %v109
    %v128 = vpop.f32.mrf.mxu0
    %v129 = vadd.f32 0.0, %v128
    %130 = vdwg.mxu0
    %v132 = vrot.slane %v129, 1
    %v135 = vadd.f32 %v98, %v129
    %v136 = vadd.f32 %v101, %v132
    %v137 = vtanh.pop %v135
    %v138 = vtanh.pop %v136
    %v139 = vmul.f32 %v137, 0.5
    %v140 = vmul.f32 %v138, 0.5
    %v141 = vadd.f32 %v139, 0.5
    %v142 = vadd.f32 %v140, 0.5
    %v143 = vmul.f32 %v141, 0.0
    %v144 = vmul.f32 %v142, 0.0
    %147 = vrot.lane.b32.xlu0 %v137, 64
    %v148 = vpop.permute.xlu0 %147
    %149 = vrot.lane.b32.xlu0 %v138, 64
    %v150 = vpop.permute.xlu0 %149
    %v153 = vmul.f32 %v141, %v148
    %v154 = vmul.f32 %v142, %v150
    %157 = vrot.lane.b32.xlu0 %v153, 32
    %v158 = vpop.permute.xlu0 %157
    %159 = vrot.lane.b32.xlu0 %v154, 32
    %v160 = vpop.permute.xlu0 %159
    %v163 = vadd.f32 %v143, %v158
    %v164 = vadd.f32 %v144, %v160
    %v165 = vtanh.pop %v163
    %v166 = vtanh.pop %v164
    %169 = vrot.lane.b32.xlu0 %v165, 64
    %v170 = vpop.permute.xlu0 %169
    %171 = vrot.lane.b32.xlu0 %v166, 64
    %v172 = vpop.permute.xlu0 %171
    %v175 = vmul.f32 %v141, %v170
    %v176 = vmul.f32 %v142, %v172
    %v179 = vrot.slane %v176, 7
    %vm180 = vcmask 1041409
    %v181 = vsel %vm180, %v179, %v175
    %182 = vrot.lane.b32.xlu0 %v181, 32
    %v183 = vpop.permute.xlu0 %182
    %v184 = vsel %vm107, %v183, 0
    %186 = vmatpush.msra.mxu0 0.0
    %187 = vmatpush.msra.mxu0 0.0
    %188 = vmatpush.msra.mxu0 0.0
    %189 = vmatpush.msra.mxu0 0.0
    %190 = vmatpush.msra.mxu0 0.0
    %191 = vmatpush.msra.mxu0 0.0
    %192 = vmatpush.msra.mxu0 0.0
    %193 = vmatpush.msra.mxu0 0.0
    %194 = vmatpush.msra.mxu0 0.0
    %195 = vmatpush.msra.mxu0 0.0
    %196 = vmatpush.msra.mxu0 0.0
    %197 = vmatpush.msra.mxu0 0.0
    %198 = vmatpush.msra.mxu0 %v106
    %199 = vmatpush.msra.mxu0 %v105
    %200 = vmatpush.msra.mxu0 %v104
    %201 = vmatpush.msra.mxu0 %v103
    %202 = vmatmul.f32.gmra.mxu0 %v184
    %v203 = vpop.f32.mrf.mxu0
    %v204 = vadd.f32 0.0, %v203
    %205 = vdwg.mxu0
    %v207 = vrot.slane %v204, 7
    %v210 = vadd.f32 %v98, %v207
    %v211 = vadd.f32 %v101, %v204
    %v212 = vtanh.pop %v210
    %v213 = vtanh.pop %v211
    %v214 = vmul.f32 %v212, 0.5
    %v215 = vmul.f32 %v213, 0.5
    %v216 = vadd.f32 %v214, 0.5
    %v217 = vadd.f32 %v215, 0.5
    %v220 = vrot.slane %v163, 7
    %v221 = vrot.slane %v164, 7
    %v224 = vmul.f32 %v216, %v220
    %v225 = vmul.f32 %v217, %v221
    %228 = vrot.lane.b32.xlu0 %v212, 64
    %v229 = vpop.permute.xlu0 %228
    %230 = vrot.lane.b32.xlu0 %v213, 64
    %v231 = vpop.permute.xlu0 %230
    %v234 = vmul.f32 %v216, %v229
    %v235 = vmul.f32 %v217, %v231
    %238 = vrot.lane.b32.xlu0 %v234, 32
    %v239 = vpop.permute.xlu0 %238
    %240 = vrot.lane.b32.xlu0 %v235, 32
    %v241 = vpop.permute.xlu0 %240
    %v244 = vadd.f32 %v224, %v239
    %v245 = vadd.f32 %v225, %v241
    %v246 = vtanh.pop %v244
    %v247 = vtanh.pop %v245
    %250 = vrot.lane.b32.xlu0 %v246, 64
    %v251 = vpop.permute.xlu0 %250
    %252 = vrot.lane.b32.xlu0 %v247, 64
    %v253 = vpop.permute.xlu0 %252
    %v256 = vmul.f32 %v216, %v251
    %v257 = vmul.f32 %v217, %v253
    %v260 = vrot.slane %v256, 1
    %v261 = vsel %vm180, %v257, %v260
    %262 = vrot.lane.b32.xlu0 %v261, 32
    %v263 = vpop.permute.xlu0 %262
    %v264 = vsel %vm107, %v263, 0
    %266 = vmatpush.msra.mxu0 0.0
    %267 = vmatpush.msra.mxu0 0.0
    %268 = vmatpush.msra.mxu0 0.0
    %269 = vmatpush.msra.mxu0 0.0
    %270 = vmatpush.msra.mxu0 0.0
    %271 = vmatpush.msra.mxu0 0.0
    %272 = vmatpush.msra.mxu0 0.0
    %273 = vmatpush.msra.mxu0 0.0
    %274 = vmatpush.msra.mxu0 0.0
    %275 = vmatpush.msra.mxu0 0.0
    %276 = vmatpush.msra.mxu0 0.0
    %277 = vmatpush.msra.mxu0 0.0
    %278 = vmatpush.msra.mxu0 %v106
    %279 = vmatpush.msra.mxu0 %v105
    %280 = vmatpush.msra.mxu0 %v104
    %281 = vmatpush.msra.mxu0 %v103
    %282 = vmatmul.f32.gmra.mxu0 %v264
    %v283 = vpop.f32.mrf.mxu0
    %v284 = vadd.f32 0.0, %v283
    %285 = vdwg.mxu0
    %v287 = vrot.slane %v284, 6
    %v288 = vrot.slane %v284, 7
    %v291 = vadd.f32 %v98, %v287
    %v292 = vadd.f32 %v101, %v288
    %v293 = vtanh.pop %v291
    %v294 = vtanh.pop %v292
    %v295 = vmul.f32 %v293, 0.5
    %v296 = vmul.f32 %v294, 0.5
    %v297 = vadd.f32 %v295, 0.5
    %v298 = vadd.f32 %v296, 0.5
    %v301 = vrot.slane %v244, 7
    %v302 = vrot.slane %v245, 7
    %v305 = vmul.f32 %v297, %v301
    %v306 = vmul.f32 %v298, %v302
    %309 = vrot.lane.b32.xlu0 %v293, 64
    %v310 = vpop.permute.xlu0 %309
    %311 = vrot.lane.b32.xlu0 %v294, 64
    %v312 = vpop.permute.xlu0 %311
    %v315 = vmul.f32 %v297, %v310
    %v316 = vmul.f32 %v298, %v312
    %319 = vrot.lane.b32.xlu0 %v315, 32
    %v320 = vpop.permute.xlu0 %319
    %321 = vrot.lane.b32.xlu0 %v316, 32
    %v322 = vpop.permute.xlu0 %321
    %v325 = vadd.f32 %v305, %v320
    %v326 = vadd.f32 %v306, %v322
    %v327 = vtanh.pop %v325
    %v328 = vtanh.pop %v326
    %331 = vrot.lane.b32.xlu0 %v327, 64
    %v332 = vpop.permute.xlu0 %331
    %333 = vrot.lane.b32.xlu0 %v328, 64
    %v334 = vpop.permute.xlu0 %333
    %v337 = vmul.f32 %v297, %v332
    %v338 = vmul.f32 %v298, %v334
    %v341 = vrot.slane %v337, 2
    %v342 = vrot.slane %v338, 1
    %v343 = vsel %vm180, %v342, %v341
    %344 = vrot.lane.b32.xlu0 %v343, 32
    %v345 = vpop.permute.xlu0 %344
    %v346 = vsel %vm107, %v345, 0
    %348 = vmatpush.msra.mxu0 0.0
    %349 = vmatpush.msra.mxu0 0.0
    %350 = vmatpush.msra.mxu0 0.0
    %351 = vmatpush.msra.mxu0 0.0
    %352 = vmatpush.msra.mxu0 0.0
    %353 = vmatpush.msra.mxu0 0.0
    %354 = vmatpush.msra.mxu0 0.0
    %355 = vmatpush.msra.mxu0 0.0
    %356 = vmatpush.msra.mxu0 0.0
    %357 = vmatpush.msra.mxu0 0.0
    %358 = vmatpush.msra.mxu0 0.0
    %359 = vmatpush.msra.mxu0 0.0
    %360 = vmatpush.msra.mxu0 %v106
    %361 = vmatpush.msra.mxu0 %v105
    %362 = vmatpush.msra.mxu0 %v104
    %363 = vmatpush.msra.mxu0 %v103
    %364 = vmatmul.f32.gmra.mxu0 %v346
    %v365 = vpop.f32.mrf.mxu0
    %v366 = vadd.f32 0.0, %v365
    %367 = vdwg.mxu0
    %v369 = vrot.slane %v366, 5
    %v370 = vrot.slane %v366, 6
    %v373 = vadd.f32 %v98, %v369
    %v374 = vadd.f32 %v101, %v370
    %v375 = vtanh.pop %v373
    %v376 = vtanh.pop %v374
    %v377 = vmul.f32 %v375, 0.5
    %v378 = vmul.f32 %v376, 0.5
    %v379 = vadd.f32 %v377, 0.5
    %v380 = vadd.f32 %v378, 0.5
    %v383 = vrot.slane %v325, 7
    %v384 = vrot.slane %v326, 7
    %v387 = vmul.f32 %v379, %v383
    %v388 = vmul.f32 %v380, %v384
    %391 = vrot.lane.b32.xlu0 %v375, 64
    %v392 = vpop.permute.xlu0 %391
    %393 = vrot.lane.b32.xlu0 %v376, 64
    %v394 = vpop.permute.xlu0 %393
    %v397 = vmul.f32 %v379, %v392
    %v398 = vmul.f32 %v380, %v394
    %401 = vrot.lane.b32.xlu0 %v397, 32
    %v402 = vpop.permute.xlu0 %401
    %403 = vrot.lane.b32.xlu0 %v398, 32
    %v404 = vpop.permute.xlu0 %403
    %v407 = vadd.f32 %v387, %v402
    %v408 = vadd.f32 %v388, %v404
    %v409 = vtanh.pop %v407
    %v410 = vtanh.pop %v408
    %413 = vrot.lane.b32.xlu0 %v409, 64
    %v414 = vpop.permute.xlu0 %413
    %415 = vrot.lane.b32.xlu0 %v410, 64
    %v416 = vpop.permute.xlu0 %415
    %v419 = vmul.f32 %v379, %v414
    %v420 = vmul.f32 %v380, %v416
    %v423 = vrot.slane %v419, 3
    %v424 = vrot.slane %v420, 2
    %v425 = vsel %vm180, %v424, %v423
    %426 = vrot.lane.b32.xlu0 %v425, 32
    %v427 = vpop.permute.xlu0 %426
    %v428 = vsel %vm107, %v427, 0
    %430 = vmatpush.msra.mxu0 0.0
    %431 = vmatpush.msra.mxu0 0.0
    %432 = vmatpush.msra.mxu0 0.0
    %433 = vmatpush.msra.mxu0 0.0
    %434 = vmatpush.msra.mxu0 0.0
    %435 = vmatpush.msra.mxu0 0.0
    %436 = vmatpush.msra.mxu0 0.0
    %437 = vmatpush.msra.mxu0 0.0
    %438 = vmatpush.msra.mxu0 0.0
    %439 = vmatpush.msra.mxu0 0.0
    %440 = vmatpush.msra.mxu0 0.0
    %441 = vmatpush.msra.mxu0 0.0
    %442 = vmatpush.msra.mxu0 %v106
    %443 = vmatpush.msra.mxu0 %v105
    %444 = vmatpush.msra.mxu0 %v104
    %445 = vmatpush.msra.mxu0 %v103
    %446 = vmatmul.f32.gmra.mxu0 %v428
    %v447 = vpop.f32.mrf.mxu0
    %v448 = vadd.f32 0.0, %v447
    %449 = vdwg.mxu0
    %v451 = vrot.slane %v448, 4
    %v452 = vrot.slane %v448, 5
    %v455 = vadd.f32 %v98, %v451
    %v456 = vadd.f32 %v101, %v452
    %v457 = vtanh.pop %v455
    %v458 = vtanh.pop %v456
    %v459 = vmul.f32 %v457, 0.5
    %v460 = vmul.f32 %v458, 0.5
    %v461 = vadd.f32 %v459, 0.5
    %v462 = vadd.f32 %v460, 0.5
    %v465 = vrot.slane %v407, 7
    %v466 = vrot.slane %v408, 7
    %v469 = vmul.f32 %v461, %v465
    %v470 = vmul.f32 %v462, %v466
    %473 = vrot.lane.b32.xlu0 %v457, 64
    %v474 = vpop.permute.xlu0 %473
    %475 = vrot.lane.b32.xlu0 %v458, 64
    %v476 = vpop.permute.xlu0 %475
    %v479 = vmul.f32 %v461, %v474
    %v480 = vmul.f32 %v462, %v476
    %483 = vrot.lane.b32.xlu0 %v479, 32
    %v484 = vpop.permute.xlu0 %483
    %485 = vrot.lane.b32.xlu0 %v480, 32
    %v486 = vpop.permute.xlu0 %485
    %v489 = vadd.f32 %v469, %v484
    %v490 = vadd.f32 %v470, %v486
    %v491 = vtanh.pop %v489
    %v492 = vtanh.pop %v490
    %495 = vrot.lane.b32.xlu0 %v491, 64
    %v496 = vpop.permute.xlu0 %495
    %497 = vrot.lane.b32.xlu0 %v492, 64
    %v498 = vpop.permute.xlu0 %497
    %v501 = vmul.f32 %v461, %v496
    %v502 = vmul.f32 %v462, %v498
    %v505 = vrot.slane %v501, 4
    %v506 = vrot.slane %v502, 3
    %v507 = vsel %vm180, %v506, %v505
    %508 = vrot.lane.b32.xlu0 %v507, 32
    %v509 = vpop.permute.xlu0 %508
    %v510 = vsel %vm107, %v509, 0
    %512 = vmatpush.msra.mxu0 0.0
    %513 = vmatpush.msra.mxu0 0.0
    %514 = vmatpush.msra.mxu0 0.0
    %515 = vmatpush.msra.mxu0 0.0
    %516 = vmatpush.msra.mxu0 0.0
    %517 = vmatpush.msra.mxu0 0.0
    %518 = vmatpush.msra.mxu0 0.0
    %519 = vmatpush.msra.mxu0 0.0
    %520 = vmatpush.msra.mxu0 0.0
    %521 = vmatpush.msra.mxu0 0.0
    %522 = vmatpush.msra.mxu0 0.0
    %523 = vmatpush.msra.mxu0 0.0
    %524 = vmatpush.msra.mxu0 %v106
    %525 = vmatpush.msra.mxu0 %v105
    %526 = vmatpush.msra.mxu0 %v104
    %527 = vmatpush.msra.mxu0 %v103
    %528 = vmatmul.f32.gmra.mxu0 %v510
    %v529 = vpop.f32.mrf.mxu0
    %v530 = vadd.f32 0.0, %v529
    %531 = vdwg.mxu0
    %v533 = vrot.slane %v530, 3
    %v534 = vrot.slane %v530, 4
    %v537 = vadd.f32 %v98, %v533
    %v538 = vadd.f32 %v101, %v534
    %v539 = vtanh.pop %v537
    %v540 = vtanh.pop %v538
    %v541 = vmul.f32 %v539, 0.5
    %v542 = vmul.f32 %v540, 0.5
    %v543 = vadd.f32 %v541, 0.5
    %v544 = vadd.f32 %v542, 0.5
    %v547 = vrot.slane %v489, 7
    %v548 = vrot.slane %v490, 7
    %v551 = vmul.f32 %v543, %v547
    %v552 = vmul.f32 %v544, %v548
    %555 = vrot.lane.b32.xlu0 %v539, 64
    %v556 = vpop.permute.xlu0 %555
    %557 = vrot.lane.b32.xlu0 %v540, 64
    %v558 = vpop.permute.xlu0 %557
    %v561 = vmul.f32 %v543, %v556
    %v562 = vmul.f32 %v544, %v558
    %565 = vrot.lane.b32.xlu0 %v561, 32
    %v566 = vpop.permute.xlu0 %565
    %567 = vrot.lane.b32.xlu0 %v562, 32
    %v568 = vpop.permute.xlu0 %567
    %v571 = vadd.f32 %v551, %v566
    %v572 = vadd.f32 %v552, %v568
    %v573 = vtanh.pop %v571
    %v574 = vtanh.pop %v572
    %577 = vrot.lane.b32.xlu0 %v573, 64
    %v578 = vpop.permute.xlu0 %577
    %579 = vrot.lane.b32.xlu0 %v574, 64
    %v580 = vpop.permute.xlu0 %579
    %v583 = vmul.f32 %v543, %v578
    %v584 = vmul.f32 %v544, %v580
    %v587 = vrot.slane %v583, 5
    %v588 = vrot.slane %v584, 4
    %v589 = vsel %vm180, %v588, %v587
    %590 = vrot.lane.b32.xlu0 %v589, 32
    %v591 = vpop.permute.xlu0 %590
    %v592 = vsel %vm107, %v591, 0
    %594 = vmatpush.msra.mxu0 0.0
    %595 = vmatpush.msra.mxu0 0.0
    %596 = vmatpush.msra.mxu0 0.0
    %597 = vmatpush.msra.mxu0 0.0
    %598 = vmatpush.msra.mxu0 0.0
    %599 = vmatpush.msra.mxu0 0.0
    %600 = vmatpush.msra.mxu0 0.0
    %601 = vmatpush.msra.mxu0 0.0
    %602 = vmatpush.msra.mxu0 0.0
    %603 = vmatpush.msra.mxu0 0.0
    %604 = vmatpush.msra.mxu0 0.0
    %605 = vmatpush.msra.mxu0 0.0
    %606 = vmatpush.msra.mxu0 %v106
    %607 = vmatpush.msra.mxu0 %v105
    %608 = vmatpush.msra.mxu0 %v104
    %609 = vmatpush.msra.mxu0 %v103
    %610 = vmatmul.f32.gmra.mxu0 %v592
    %v611 = vpop.f32.mrf.mxu0
    %v612 = vadd.f32 0.0, %v611
    %613 = vdwg.mxu0
    %v615 = vrot.slane %v612, 2
    %v616 = vrot.slane %v612, 3
    %v619 = vadd.f32 %v98, %v615
    %v620 = vadd.f32 %v101, %v616
    %v621 = vtanh.pop %v619
    %v622 = vtanh.pop %v620
    %v623 = vmul.f32 %v621, 0.5
    %v624 = vmul.f32 %v622, 0.5
    %v625 = vadd.f32 %v623, 0.5
    %v626 = vadd.f32 %v624, 0.5
    %v629 = vrot.slane %v571, 7
    %v630 = vrot.slane %v572, 7
    %v633 = vmul.f32 %v625, %v629
    %v634 = vmul.f32 %v626, %v630
    %637 = vrot.lane.b32.xlu0 %v621, 64
    %v638 = vpop.permute.xlu0 %637
    %639 = vrot.lane.b32.xlu0 %v622, 64
    %v640 = vpop.permute.xlu0 %639
    %v643 = vmul.f32 %v625, %v638
    %v644 = vmul.f32 %v626, %v640
    %647 = vrot.lane.b32.xlu0 %v643, 32
    %v648 = vpop.permute.xlu0 %647
    %649 = vrot.lane.b32.xlu0 %v644, 32
    %v650 = vpop.permute.xlu0 %649
    %v653 = vadd.f32 %v633, %v648
    %v654 = vadd.f32 %v634, %v650
    %v655 = vtanh.pop %v653
    %v656 = vtanh.pop %v654
    %659 = vrot.lane.b32.xlu0 %v655, 64
    %v660 = vpop.permute.xlu0 %659
    %661 = vrot.lane.b32.xlu0 %v656, 64
    %v662 = vpop.permute.xlu0 %661
    %v665 = vmul.f32 %v625, %v660
    %v666 = vmul.f32 %v626, %v662
    %v669 = vrot.slane %v665, 6
    %v670 = vrot.slane %v666, 5
    %v671 = vsel %vm180, %v670, %v669
    %672 = vrot.lane.b32.xlu0 %v671, 32
    %v673 = vpop.permute.xlu0 %672
    %v674 = vsel %vm107, %v673, 0
    %676 = vmatpush.msra.mxu0 0.0
    %677 = vmatpush.msra.mxu0 0.0
    %678 = vmatpush.msra.mxu0 0.0
    %679 = vmatpush.msra.mxu0 0.0
    %680 = vmatpush.msra.mxu0 0.0
    %681 = vmatpush.msra.mxu0 0.0
    %682 = vmatpush.msra.mxu0 0.0
    %683 = vmatpush.msra.mxu0 0.0
    %684 = vmatpush.msra.mxu0 0.0
    %685 = vmatpush.msra.mxu0 0.0
    %686 = vmatpush.msra.mxu0 0.0
    %687 = vmatpush.msra.mxu0 0.0
    %688 = vmatpush.msra.mxu0 %v106
    %689 = vmatpush.msra.mxu0 %v105
    %690 = vmatpush.msra.mxu0 %v104
    %691 = vmatpush.msra.mxu0 %v103
    %692 = vmatmul.f32.gmra.mxu0 %v674
    %v693 = vpop.f32.mrf.mxu0
    %v694 = vadd.f32 0.0, %v693
    %695 = vdwg.mxu0
    %v697 = vrot.slane %v694, 1
    %v698 = vrot.slane %v694, 2
    %v701 = vadd.f32 %v98, %v697
    %v702 = vadd.f32 %v101, %v698
    %v703 = vtanh.pop %v701
    %v704 = vtanh.pop %v702
    %v705 = vmul.f32 %v703, 0.5
    %v706 = vmul.f32 %v704, 0.5
    %v707 = vadd.f32 %v705, 0.5
    %v708 = vadd.f32 %v706, 0.5
    %v711 = vrot.slane %v653, 7
    %v712 = vrot.slane %v654, 7
    %v715 = vmul.f32 %v707, %v711
    %v716 = vmul.f32 %v708, %v712
    %719 = vrot.lane.b32.xlu0 %v703, 64
    %v720 = vpop.permute.xlu0 %719
    %721 = vrot.lane.b32.xlu0 %v704, 64
    %v722 = vpop.permute.xlu0 %721
    %v725 = vmul.f32 %v707, %v720
    %v726 = vmul.f32 %v708, %v722
    %729 = vrot.lane.b32.xlu0 %v725, 32
    %v730 = vpop.permute.xlu0 %729
    %731 = vrot.lane.b32.xlu0 %v726, 32
    %v732 = vpop.permute.xlu0 %731
    %v735 = vadd.f32 %v715, %v730
    %v736 = vadd.f32 %v716, %v732
    %v737 = vtanh.pop %v735
    %v738 = vtanh.pop %v736
    %741 = vrot.lane.b32.xlu0 %v737, 64
    %v742 = vpop.permute.xlu0 %741
    %743 = vrot.lane.b32.xlu0 %v738, 64
    %v744 = vpop.permute.xlu0 %743
    %v747 = vmul.f32 %v707, %v742
    %v748 = vmul.f32 %v708, %v744
    %v751 = vrot.slane %v748, 7
    %752 = vrot.lane.b32.xlu0 %v747, 32
    %v753 = vpop.permute.xlu0 %752
    %754 = vrot.lane.b32.xlu0 %v751, 32
    %v755 = vpop.permute.xlu0 %754
    %vm758 = vcmask 261127
    %759 = vst.msk [vmem:[#allocation9 - $0x7] sm:$0x80] %vm758, %v753
    %vm760 = vcmask 253952
    %761 = vst.msk [vmem:[#allocation9 + $0x1] sm:$0x1] %vm760, %v755
    %v764 = vrot.slane %v736, 7
    %765 = vrot.lane.b32.xlu0 %v735, 96
    %v766 = vpop.permute.xlu0 %765
    %767 = vrot.lane.b32.xlu0 %v764, 96
    %v768 = vpop.permute.xlu0 %767
    %771 = vst.msk [vmem:[#allocation11 - $0x7] sm:$0x80] %vm758, %v766
    %772 = vst.msk [vmem:[#allocation11 + $0x1] sm:$0x1] %vm760, %v768
    %774 = vrot.lane.b32.xlu0 %v261, 64
    %v775 = vpop.permute.xlu0 %774
    %777 = vrot.lane.b32.xlu0 %v343, 96
    %v778 = vpop.permute.xlu0 %777
    %782 = vrot.lane.b32.xlu0 %v589, 64
    %v783 = vpop.permute.xlu0 %782
    %785 = vrot.lane.b32.xlu0 %v671, 96
    %v786 = vpop.permute.xlu0 %785
    %v788 = vrot.slane %v747, 7
    %v789 = vrot.slane %v748, 6
    %v790 = vsel %vm180, %v789, %v788
    %v792 = vsel %vm107, %v183, %v775
    %vm793 = vcmask 523264
    %v794 = vsel %vm793, %v792, %v778
    %vm795 = vcmask 785408
    %v796 = vsel %vm795, %v794, %v425
    %v797 = vsel %vm107, %v509, %v783
    %v798 = vsel %vm793, %v797, %v786
    %v799 = vsel %vm795, %v798, %v790
    %v800 = vld [vmem:[#allocation6] sm:$0xff]
    %v801 = vld [vmem:[#allocation6 + $0x8] sm:$0xff]
    %v802 = vld [vmem:[#allocation6 + $0x10] sm:$0xff]
    %v803 = vld [vmem:[#allocation6 + $0x18] sm:$0xff]
    %v804 = vld [vmem:[#allocation6 + $0x20] sm:$0xff]
    %v805 = vld [vmem:[#allocation6 + $0x28] sm:$0xff]
    %v806 = vld [vmem:[#allocation6 + $0x30] sm:$0xff]
    %v807 = vld [vmem:[#allocation6 + $0x38] sm:$0xff]
    %v808 = vld [vmem:[#allocation6 + $0x40] sm:$0xff]
    %v809 = vld [vmem:[#allocation6 + $0x48] sm:$0xff]
    %v810 = vld [vmem:[#allocation6 + $0x50] sm:$0xff]
    %v811 = vld [vmem:[#allocation6 + $0x58] sm:$0xff]
    %v812 = vld [vmem:[#allocation6 + $0x60] sm:$0xff]
    %v813 = vld [vmem:[#allocation6 + $0x68] sm:$0xff]
    %v814 = vld [vmem:[#allocation6 + $0x70] sm:$0xff]
    %v815 = vld [vmem:[#allocation6 + $0x78] sm:$0xff]
    %v816 = vld [vmem:[#allocation6 + $0x80] sm:$0xff]
    %v817 = vld [vmem:[#allocation6 + $0x88] sm:$0xff]
    %v818 = vld [vmem:[#allocation6 + $0x90] sm:$0xff]
    %v819 = vld [vmem:[#allocation6 + $0x98] sm:$0xff]
    %v820 = vld [vmem:[#allocation6 + $0xa0] sm:$0xff]
    %v821 = vld [vmem:[#allocation6 + $0xa8] sm:$0xff]
    %v822 = vld [vmem:[#allocation6 + $0xb0] sm:$0xff]
    %v823 = vld [vmem:[#allocation6 + $0xb8] sm:$0xff]
    %v824 = vld [vmem:[#allocation6 + $0xc0] sm:$0xff]
    %v825 = vld [vmem:[#allocation6 + $0xc8] sm:$0xff]
    %v826 = vld [vmem:[#allocation6 + $0xd0] sm:$0xff]
    %v827 = vld [vmem:[#allocation6 + $0xd8] sm:$0xff]
    %v828 = vld [vmem:[#allocation6 + $0xe0] sm:$0xff]
    %v829 = vld [vmem:[#allocation6 + $0xe8] sm:$0xff]
    %v830 = vld [vmem:[#allocation6 + $0xf0] sm:$0xff]
    %v831 = vld [vmem:[#allocation6 + $0xf8] sm:$0xff]
    %v832 = vld [vmem:[#allocation2] sm:$0x1]
    %v834 = vperm.slane %v832, 0
    %835 = vset.pattern.permute.xlu0 0
    %836 = vperm.xlu0 %835, %v834
    %v837 = vpop.permute.xlu0 %836
    %839 = vmatpush.msra.mxu0 %v815
    %840 = vmatpush.msra.mxu0 %v814
    %841 = vmatpush.msra.mxu0 %v813
    %842 = vmatpush.msra.mxu0 %v812
    %843 = vmatpush.msra.mxu0 %v811
    %844 = vmatpush.msra.mxu0 %v810
    %845 = vmatpush.msra.mxu0 %v809
    %846 = vmatpush.msra.mxu0 %v808
    %847 = vmatpush.msra.mxu0 %v807
    %848 = vmatpush.msra.mxu0 %v806
    %849 = vmatpush.msra.mxu0 %v805
    %850 = vmatpush.msra.mxu0 %v804
    %851 = vmatpush.msra.mxu0 %v803
    %852 = vmatpush.msra.mxu0 %v802
    %853 = vmatpush.msra.mxu0 %v801
    %854 = vmatpush.msra.mxu0 %v800
    %855 = vmatmul.f32.gmra.mxu0 %v796
    %v856 = vpop.f32.mrf.mxu0
    %v857 = vadd.f32 %v837, %v856
    %858 = vdwg.mxu0
    %859 = vmatpush.msra.mxu0 %v831
    %860 = vmatpush.msra.mxu0 %v830
    %861 = vmatpush.msra.mxu0 %v829
    %862 = vmatpush.msra.mxu0 %v828
    %863 = vmatpush.msra.mxu0 %v827
    %864 = vmatpush.msra.mxu0 %v826
    %865 = vmatpush.msra.mxu0 %v825
    %866 = vmatpush.msra.mxu0 %v824
    %867 = vmatpush.msra.mxu0 %v823
    %868 = vmatpush.msra.mxu0 %v822
    %869 = vmatpush.msra.mxu0 %v821
    %870 = vmatpush.msra.mxu0 %v820
    %871 = vmatpush.msra.mxu0 %v819
    %872 = vmatpush.msra.mxu0 %v818
    %873 = vmatpush.msra.mxu0 %v817
    %874 = vmatpush.msra.mxu0 %v816
    %875 = vmatmul.f32.gmra.mxu0 %v799
    %v876 = vpop.f32.mrf.mxu0
    %v877 = vadd.f32 %v857, %v876
    %878 = vdwg.mxu0
    %879 = vst [vmem:[#allocation8] sm:$0x3] %v877
    // Predicated region
    $region34: #{tpu_custom_call.1} parent=1 // pred_check
      _
    $region35: #{tpu_custom_call.1} parent=1 // pred_check_branch
      %881 = sbr.rel (0) target = $region37
    $region36: #{tpu_custom_call.1} parent=1 // pred_region
      %883 = vsyncadd [#allocation5], 0
      %s885 = sshll.u32 [#allocation8], 4
      %s886 = int_to_ptr.vmem [resolvable:$true] %s885
      %s887 = sshll.u32 %s6, 4
      %s888 = int_to_ptr.hbm [resolvable:$true] %s887
      %890 = dma.vmem_to_hbm [thread:$0]  %s886, 32, %s888, [#allocation5]
    $region37: #{tpu_custom_call.1} parent=1 // pred_fallthru
      _
    // Predicated region
    $region38: #{tpu_custom_call.1} parent=1 // pred_check
      _
    $region39: #{tpu_custom_call.1} parent=1 // pred_check_branch
      %892 = sbr.rel (0) target = $region41
    $region40: #{tpu_custom_call.1} parent=1 // pred_region
      %894 = vsyncadd [#allocation10], 0
      %s896 = sshll.u32 [#allocation9], 4
      %s897 = int_to_ptr.vmem [resolvable:$true] %s896
      %s898 = sshll.u32 %s7, 4
      %s899 = int_to_ptr.hbm [resolvable:$true] %s898
      %901 = dma.vmem_to_hbm [thread:$0]  %s897, 32, %s899, [#allocation10]
    $region41: #{tpu_custom_call.1} parent=1 // pred_fallthru
      _
    // Predicated region
    $region42: #{tpu_custom_call.1} parent=1 // pred_check
      _
    $region43: #{tpu_custom_call.1} parent=1 // pred_check_branch
      %903 = sbr.rel (0) target = $region45
    $region44: #{tpu_custom_call.1} parent=1 // pred_region
      %905 = vsyncadd [#allocation10], 0
      %s907 = sshll.u32 [#allocation11], 4
      %s908 = int_to_ptr.vmem [resolvable:$true] %s907
      %s909 = sshll.u32 %s8, 4
      %s910 = int_to_ptr.hbm [resolvable:$true] %s909
      %912 = dma.vmem_to_hbm [thread:$0]  %s908, 32, %s910, [#allocation10]
    $region45: #{tpu_custom_call.1} parent=1 // pred_fallthru
      _
    // Predicated region
    $region46: #{tpu_custom_call.1} parent=1 // pred_check
      _
    $region47: #{tpu_custom_call.1} parent=1 // pred_check_branch
      %914 = sbr.rel (0) target = $region49
    $region48: #{tpu_custom_call.1} parent=1 // pred_region
      %916 = dma.done [#allocation5], 32
    $region49: #{tpu_custom_call.1} parent=1 // pred_fallthru
      _
    // Predicated region
    $region50: #{tpu_custom_call.1} parent=1 // pred_check
      _
    $region51: #{tpu_custom_call.1} parent=1 // pred_check_branch
      %918 = sbr.rel (0) target = $region53
    $region52: #{tpu_custom_call.1} parent=1 // pred_region
      %920 = dma.done [#allocation10], 32
    $region53: #{tpu_custom_call.1} parent=1 // pred_fallthru
      _
    // Predicated region
    $region54: #{tpu_custom_call.1} parent=1 // pred_check
      _
    $region55: #{tpu_custom_call.1} parent=1 // pred_check_branch
      %922 = sbr.rel (0) target = $region57
    $region56: #{tpu_custom_call.1} parent=1 // pred_region
      %924 = dma.done [#allocation10], 32
    $region57: #{tpu_custom_call.1} parent=1 // pred_fallthru
      _
    %925 = vsyncpa [#allocation4], 1
    %926 = vsyncpa [#allocation7], 1
    %927 = vsyncpa [#allocation5], 1
    %928 = vsyncpa [#allocation10], 1

</llo_original>
